<compile_context>
chip_gen: v7x
topology: tpu7x:2x2x1
jax: 0.10.0
libtpu: 0.0.40
codegen_flags: <defaults>
</compile_context>

<pallas_src>
import functools

import jax
import jax.numpy as jnp
from jax.experimental import pallas as pl
from jax.experimental.pallas import tpu as pltpu

BN_EPS = 1e-5
LANE = 128
SUBLANE = 8

_HAS_BUFFERED = hasattr(pl, "Buffered")


def _round_up(n, m):
    return ((n + m - 1) // m) * m


def _pad_to(a, shape):
    if tuple(a.shape) == tuple(shape):
        return a
    return jnp.pad(a, [(0, s - d) for d, s in zip(a.shape, shape)])


def _vmem_capacity_bytes():
    """Physical per-core VMEM (generation-aware); conservative fallback = v7x (64 MiB)."""
    try:
        return int(pltpu.get_tpu_info().vmem_capacity_bytes)
    except Exception:
        return 64 * 1024 * 1024


def _resident_spec(shape):
    """BlockSpec for a grid-invariant operand (weights / packed biases).

    The block index never changes across the grid, so the tile is fetched once and
    stays VMEM-resident; Buffered(1) avoids allocating a useless second buffer."""
    index_map = lambda *_: (0,) * len(shape)
    if _HAS_BUFFERED:
        try:
            return pl.BlockSpec(shape, index_map, pipeline_mode=pl.Buffered(1))
        except TypeError:  # older Pallas without pipeline_mode support
            pass
    return pl.BlockSpec(shape, index_map)


# ---------------------------------------------------------------------------
# kernels
# ---------------------------------------------------------------------------

def _fc_plain_kernel(x_ref, w1_ref, w2_ref, w3_ref, bias_ref, b3_ref, o_ref):
    """relu(fc1) -> fc2 -> relu -> fc3 (weight_norm / spectral_norm weights are
    reparametrized in prepare_params before the call)."""
    x = x_ref[...]                                       # (TB, In_p) bf16
    b1 = bias_ref[0:1, :]                                # (1, Hp)    f32
    b2 = bias_ref[1:2, :]

    h = jnp.dot(x, w1_ref[...], preferred_element_type=jnp.float32) + b1
    h = jnp.maximum(h, 0.0)
    h2 = jnp.dot(h.astype(w2_ref.dtype), w2_ref[...],
                 preferred_element_type=jnp.float32) + b2
    h2 = jnp.maximum(h2, 0.0)
    o_ref[...] = (jnp.dot(h2.astype(w3_ref.dtype), w3_ref[...],
                          preferred_element_type=jnp.float32)
                  + b3_ref[...]).astype(o_ref.dtype)


def _fc_bn_kernel(x_ref, w1_ref, w2_ref, w3_ref, bias_ref, b3_ref, o_ref):
    """Fused whole-batch BN path (used when the full batch fits the VMEM budget):
    fc1 -> BN1(batch stats) -> relu(fc2) -> BN2 -> fc3 (training-mode BN, biased var)."""
    x = x_ref[...]                                       # (B, In_p) bf16
    b1, g1, be1 = bias_ref[0:1, :], bias_ref[1:2, :], bias_ref[2:3, :]
    b2, g2, be2 = bias_ref[3:4, :], bias_ref[4:5, :], bias_ref[5:6, :]

    h = jnp.dot(x, w1_ref[...], preferred_element_type=jnp.float32) + b1
    mu1 = jnp.mean(h, axis=0, keepdims=True)
    d1 = h - mu1
    var1 = jnp.mean(d1 * d1, axis=0, keepdims=True)
    h = d1 * jax.lax.rsqrt(var1 + BN_EPS) * g1 + be1

    h2 = jnp.dot(h.astype(w2_ref.dtype), w2_ref[...],
                 preferred_element_type=jnp.float32) + b2
    h2 = jnp.maximum(h2, 0.0)
    mu2 = jnp.mean(h2, axis=0, keepdims=True)
    d2 = h2 - mu2
    var2 = jnp.mean(d2 * d2, axis=0, keepdims=True)
    h2 = d2 * jax.lax.rsqrt(var2 + BN_EPS) * g2 + be2

    o_ref[...] = (jnp.dot(h2.astype(w3_ref.dtype), w3_ref[...],
                          preferred_element_type=jnp.float32)
                  + b3_ref[...]).astype(o_ref.dtype)


def _fc_bn_tiled_kernel(x_ref, w1_ref, w2_ref, w3_ref, bias_ref, b3_ref, o_ref,
                        stats_ref, *, batch, tb):
    """Batch-tiled three-phase BN path.  grid = (phase=3, batch_tile), both 'arbitrary'.

    phase 0: accumulate sum / sum-of-squares of h1 = fc1(x)+b1        (BN1 stats)
    phase 1: normalize h1, h2 = relu(fc2(.)+b2), accumulate its stats (BN2 stats)
    phase 2: normalize h2, fc3, write output tile

    fc1/fc2 are recomputed per phase (cheaper than staging B*Hp f32 activations in
    HBM).  Rows >= `batch` (ragged last tile) are masked out of the statistics.
    stats_ref rows: 0=sum1, 1=sumsq1, 2=sum2, 3=sumsq2."""
    phase = pl.program_id(0)
    tile = pl.program_id(1)
    inv_b = 1.0 / float(batch)

    b1, g1, be1 = bias_ref[0:1, :], bias_ref[1:2, :], bias_ref[2:3, :]
    b2, g2, be2 = bias_ref[3:4, :], bias_ref[4:5, :], bias_ref[5:6, :]

    row = tile * tb + jax.lax.broadcasted_iota(jnp.int32, (tb, 1), 0)
    row_mask = row < batch                                # (tb, 1)

    @pl.when((phase == 0) & (tile == 0))
    def _():
        stats_ref[...] = jnp.zeros_like(stats_ref)

    # fc1 is needed in every phase.
    h1 = jnp.dot(x_ref[...], w1_ref[...], preferred_element_type=jnp.float32) + b1

    def _bn1(h):
        mu = stats_ref[0:1, :] * inv_b
        var = stats_ref[1:2, :] * inv_b - mu * mu
        return (h - mu) * jax.lax.rsqrt(var + BN_EPS) * g1 + be1

    def _fc2_relu(h1n):
        h2 = jnp.dot(h1n.astype(w2_ref.dtype), w2_ref[...],
                     preferred_element_type=jnp.float32) + b2
        return jnp.maximum(h2, 0.0)

    @pl.when(phase == 0)          # pass 1: BN1 statistics
    def _():
        hm = jnp.where(row_mask, h1, 0.0)
        # TODO(synk): if the XLU becomes the binding slot (v6e), route these axis-0
        # sums through the MXU (ones-row matmul) instead of cross-sublane reductions.
        stats_ref[0:1, :] += jnp.sum(hm, axis=0, keepdims=True)
        stats_ref[1:2, :] += jnp.sum(hm * hm, axis=0, keepdims=True)

    @pl.when(phase == 1)          # pass 2: BN2 statistics
    def _():
        h2 = _fc2_relu(_bn1(h1))
        hm = jnp.where(row_mask, h2, 0.0)
        stats_ref[2:3, :] += jnp.sum(hm, axis=0, keepdims=True)
        stats_ref[3:4, :] += jnp.sum(hm * hm, axis=0, keepdims=True)

    @pl.when(phase == 2)          # pass 3: normalize + fc3, write out
    def _():
        h2 = _fc2_relu(_bn1(h1))
        mu2 = stats_ref[2:3, :] * inv_b
        var2 = stats_ref[3:4, :] * inv_b - mu2 * mu2
        h2n = (h2 - mu2) * jax.lax.rsqrt(var2 + BN_EPS) * g2 + be2
        o_ref[...] = (jnp.dot(h2n.astype(w3_ref.dtype), w3_ref[...],
                              preferred_element_type=jnp.float32)
                      + b3_ref[...]).astype(o_ref.dtype)


# ---------------------------------------------------------------------------
# parameter glue (hoisted out of the hot path)
# ---------------------------------------------------------------------------

def _spectral_normalize(w_t, u, n_power_iterations=1, eps=1e-12):
    """torch.nn.utils.spectral_norm forward: one power-iteration step on the stored
    u, then W / sigma.  w_t is stored [in, out] (transpose of PyTorch's [out, in]);
    u has shape [out]."""
    def _l2n(v):
        return v / (jnp.linalg.norm(v) + eps)
    v = None
    for _ in range(n_power_iterations):
        v = _l2n(w_t @ u)            # normalize(W^T u) -> [in]
        u = _l2n(v @ w_t)            # normalize(W v)   -> [out]
    sigma = jnp.dot(u, v @ w_t)      # u^T W v
    return w_t / sigma


def prepare_params(params, which_norm, compute_dtype=jnp.bfloat16):
    """One-time parameter glue: norm reparametrization, lane padding to multiples of
    128, MXU-dtype cast, and packing of the small per-feature vectors into one
    (8, Hp) array (fewer BlockSpec windows / DMA descriptors)."""
    if which_norm not in ("batch_norm", "weight_norm", "spectral_norm"):
        raise ValueError(f"unknown which_norm: {which_norm!r}")

    in_dim, hid = params["w1"].shape
    out_dim = params["w3"].shape[1]
    in_p = _round_up(in_dim, LANE)
    hid_p = _round_up(hid, LANE)
    out_p = _round_up(out_dim, LANE)

    w1, w2, w3 = params["w1"], params["w2"], params["w3"]
    if which_norm == "weight_norm":
        # W = g * V / ||V|| (per output column; weights stored [in, out])
        w1 = params["g1"] * w1 / jnp.linalg.norm(w1, axis=0, keepdims=True)
        w2 = params["g2"] * w2 / jnp.linalg.norm(w2, axis=0, keepdims=True)
    elif which_norm == "spectral_norm":
        # TODO(synk): torch updates the power-iteration u buffer every training-mode
        # forward; here it is applied once (inference parity).
        w1 = _spectral_normalize(w1, params["u1"])
        w2 = _spectral_normalize(w2, params["u2"])

    if which_norm == "batch_norm":
        rows = (params["b1"], params["gamma1"], params["beta1"],
                params["b2"], params["gamma2"], params["beta2"])
    else:
        rows = (params["b1"], params["b2"])
    bias_pack = jnp.zeros((SUBLANE, hid_p), jnp.float32)
    for r, v in enumerate(rows):
        bias_pack = bias_pack.at[r, :v.shape[-1]].set(
            v.reshape(-1).astype(jnp.float32))

    return {
        "w1": _pad_to(w1, (in_p, hid_p)).astype(compute_dtype),
        "w2": _pad_to(w2, (hid_p, hid_p)).astype(compute_dtype),
        "w3": _pad_to(w3, (hid_p, out_p)).astype(compute_dtype),
        "bias_pack": bias_pack,
        "b3": _pad_to(params["b3"], (1, out_p)).astype(jnp.float32),
    }


# ---------------------------------------------------------------------------
# forward wrapper
# ---------------------------------------------------------------------------

def fc_net_forward(x, prepped, *, which_norm, out_dim, batch_tile=1024,
                   out_dtype=jnp.float32, bn_tile_rows=None):
    """x: [B, input_num] f32.  prepped: output of prepare_params().

    `bn_tile_rows` forces the tiled three-phase batch-norm kernel with that batch
    tile; otherwise it is used only when the whole batch does not fit the VMEM budget.
    `out_dtype=jnp.bfloat16` halves output HBM writeback if downstream tolerates it."""
    B = x.shape[0]
    In_p, Hp = prepped["w1"].shape
    Op_p = prepped["w3"].shape[1]
    compute_dtype = prepped["w1"].dtype
    out_itemsize = jnp.dtype(out_dtype).itemsize

    # One-time feature-axis pad -> lane-dense (multiple-of-128) operands.
    x_p = _pad_to(x, (B, In_p)).astype(compute_dtype)

    # ---- generation-aware VMEM budget -> batch-tile rows -----------------------
    cap = _vmem_capacity_bytes()
    weight_buffers = 1 if _HAS_BUFFERED else 2
    weight_bytes = weight_buffers * sum(
        prepped[k].size * prepped[k].dtype.itemsize
        for k in ("w1", "w2", "w3", "bias_pack", "b3"))
    # per-row: double-buffered bf16 x tile, f32 h/h2 (+ bf16 casts), f32 logits,
    # double-buffered out tile.
    itm = 14 if which_norm == "batch_norm" else 12
    bytes_per_row = 2 * 2 * In_p + itm * Hp + (2 * out_itemsize + 4) * Op_p
    rows_budget = max(8, (int(cap * 0.75) - weight_bytes) // bytes_per_row)
    vmem_limit = min(max(32 * 1024 * 1024, int(cap * 0.85)), 110 * 1024 * 1024)

    use_tiled_bn = which_norm == "batch_norm" and (
        bn_tile_rows is not None or B > rows_budget)

    if which_norm == "batch_norm" and not use_tiled_bn:
        # Whole batch (incl. f32 h1/h2 intermediates) fits the VMEM budget: single
        # fused block -- BN statistics need the full batch anyway.
        tb, b_pad = B, B
        grid = (1,)
        kernel = _fc_bn_kernel
        x_map = lambda i: (0, 0)
        o_map = lambda i: (0, 0)
        semantics = ("arbitrary",)
        scratch = []
        flops = 2 * B * (In_p * Hp + Hp * Hp + Hp * Op_p)
    elif use_tiled_bn:
        # Batch-tiled three-phase BN (P3 accumulator over an 'arbitrary' grid).
        tb = bn_tile_rows if bn_tile_rows is not None else max(
            LANE, min(batch_tile, (rows_budget // LANE) * LANE))
        tb = min(tb, B)
        if tb != B:
            tb = max(SUBLANE, (tb // SUBLANE) * SUBLANE)
        b_pad = _round_up(B, tb)
        grid = (3, b_pad // tb)
        kernel = functools.partial(_fc_bn_tiled_kernel, batch=B, tb=tb)
        x_map = lambda p, i: (i, 0)
        # Phases 0/1 park the output window on block 0 (never written there);
        # phase 2 walks the blocks and writes them, so every block's visits are
        # consecutive and only kernel-written data is flushed to HBM.
        o_map = lambda p, i: (jnp.where(p == 2, i, 0), 0)
        semantics = ("arbitrary", "arbitrary")
        scratch = [pltpu.VMEM((SUBLANE, Hp), jnp.float32)]  # sum1/sumsq1/sum2/sumsq2
        flops = 2 * b_pad * (3 * In_p * Hp + 2 * Hp * Hp + Hp * Op_p)
    else:
        # Plain path: relu(fc1) -> relu(fc2) -> fc3, batch-tiled "parallel" grid
        # (weights VMEM-resident via constant index_maps).
        cap_rows = min(batch_tile, rows_budget)
        if B <= cap_rows and B < 256:
            tb, b_pad = B, B                       # one full-dim tile: no pad/slice
        else:
            if B <= cap_rows:                      # fits one tile, split for megacore
                tb = _round_up(pl.cdiv(B, 2), LANE)
            else:
                g = LANE if cap_rows >= LANE else SUBLANE
                tb = max(g, (cap_rows // g) * g)   # MXU-M aligned tile
            b_pad = _round_up(B, tb)
        grid = (b_pad // tb,)
        kernel = _fc_plain_kernel
        x_map = lambda i: (i, 0)
        o_map = lambda i: (i, 0)
        semantics = ("parallel",)
        scratch = []
        flops = 2 * b_pad * (In_p * Hp + Hp * Hp + Hp * Op_p)

    if b_pad != B:
        x_p = _pad_to(x_p, (b_pad, In_p))

    # TODO(synk): if xprof shows exposed DMA on the plain path, bump the x/out specs
    # to pipeline_mode=pl.Buffered(3) (weights stay Buffered(1)).
    in_specs = [pl.BlockSpec((tb, In_p), x_map)] + [
        _resident_spec(prepped[k].shape)
        for k in ("w1", "w2", "w3", "bias_pack", "b3")]
    out_specs = pl.BlockSpec((tb, Op_p), o_map)

    n_pass = 3 if use_tiled_bn else 1
    bytes_accessed = int(n_pass * x_p.size * x_p.dtype.itemsize
                         + weight_bytes // weight_buffers
                         + b_pad * Op_p * out_itemsize)
    transcendentals = 2 * Hp if which_norm == "batch_norm" else 0

    out = pl.pallas_call(
        kernel,
        grid=grid,
        in_specs=in_specs,
        out_specs=out_specs,
        out_shape=jax.ShapeDtypeStruct((b_pad, Op_p), out_dtype),
        scratch_shapes=scratch,
        compiler_params=pltpu.CompilerParams(
            dimension_semantics=semantics,
            vmem_limit_bytes=vmem_limit),
        cost_estimate=pl.CostEstimate(flops=flops,
                                      transcendentals=transcendentals,
                                      bytes_accessed=bytes_accessed),
    )(x_p, prepped["w1"], prepped["w2"], prepped["w3"],
      prepped["bias_pack"], prepped["b3"])

    if b_pad != B:
        out = out[:B]
    if out_dim != Op_p:
        out = out[:, :out_dim]
    return out


# ---------------------------------------------------------------------------
# init / reference / demo
# ---------------------------------------------------------------------------

def init_params(key, input_num, output_num, hidden_dim):
    ks = jax.random.split(key, 10)
    s1 = 1.0 / jnp.sqrt(input_num)
    s2 = 1.0 / jnp.sqrt(hidden_dim)
    u1 = jax.random.normal(ks[8], (hidden_dim,), jnp.float32)
    u2 = jax.random.normal(ks[9], (hidden_dim,), jnp.float32)
    return {
        # weights stored [in, out] (transpose of PyTorch's [out, in])
        "w1": jax.random.uniform(ks[0], (input_num, hidden_dim), jnp.float32, -s1, s1),
        "b1": jax.random.uniform(ks[1], (1, hidden_dim), jnp.float32, -s1, s1),
        "w2": jax.random.uniform(ks[2], (hidden_dim, hidden_dim), jnp.float32, -s2, s2),
        "b2": jax.random.uniform(ks[3], (1, hidden_dim), jnp.float32, -s2, s2),
        "w3": jax.random.uniform(ks[4], (hidden_dim, output_num), jnp.float32, -s2, s2),
        "b3": jax.random.uniform(ks[5], (1, output_num), jnp.float32, -s2, s2),
        # batch_norm affine (PyTorch init: gamma=1, beta=0)
        "gamma1": jnp.ones((1, hidden_dim), jnp.float32),
        "beta1": jnp.zeros((1, hidden_dim), jnp.float32),
        "gamma2": jnp.ones((1, hidden_dim), jnp.float32),
        "beta2": jnp.zeros((1, hidden_dim), jnp.float32),
        # weight_norm per-output-column g
        "g1": 1.0 + 0.1 * jax.random.normal(ks[6], (1, hidden_dim), jnp.float32),
        "g2": 1.0 + 0.1 * jax.random.normal(ks[7], (1, hidden_dim), jnp.float32),
        # spectral_norm power-iteration u buffers (shape [out_features])
        "u1": u1 / jnp.linalg.norm(u1),
        "u2": u2 / jnp.linalg.norm(u2),
    }


def _reference(x, params, which_norm, compute_dtype=jnp.bfloat16):
    """Pure-JAX reference mirroring FC_net.forward (and the kernel's bf16 casts)."""
    def mm(a, b):
        return jnp.dot(a.astype(compute_dtype), b.astype(compute_dtype),
                       preferred_element_type=jnp.float32)

    w1, w2, w3 = params["w1"], params["w2"], params["w3"]
    if which_norm == "weight_norm":
        w1 = params["g1"] * w1 / jnp.linalg.norm(w1, axis=0, keepdims=True)
        w2 = params["g2"] * w2 / jnp.linalg.norm(w2, axis=0, keepdims=True)
    elif which_norm == "spectral_norm":
        w1 = _spectral_normalize(w1, params["u1"])
        w2 = _spectral_normalize(w2, params["u2"])

    if which_norm == "batch_norm":
        h = mm(x, w1) + params["b1"]
        mu = h.mean(0, keepdims=True)
        var = ((h - mu) ** 2).mean(0, keepdims=True)
        h = (h - mu) * jax.lax.rsqrt(var + BN_EPS) * params["gamma1"] + params["beta1"]
        h2 = jnp.maximum(mm(h, w2) + params["b2"], 0.0)
        mu2 = h2.mean(0, keepdims=True)
        var2 = ((h2 - mu2) ** 2).mean(0, keepdims=True)
        h2 = (h2 - mu2) * jax.lax.rsqrt(var2 + BN_EPS) * params["gamma2"] + params["beta2"]
        return mm(h2, w3) + params["b3"]
    h = jnp.maximum(mm(x, w1) + params["b1"], 0.0)
    h2 = jnp.maximum(mm(h, w2) + params["b2"], 0.0)
    return mm(h2, w3) + params["b3"]


if __name__ == "__main__":
    B, INPUT_NUM, HIDDEN_DIM, OUTPUT_NUM = 48, 16, 32, 8

    key = jax.random.PRNGKey(0)
    kx, kp = jax.random.split(key)
    x = jax.random.normal(kx, (B, INPUT_NUM), dtype=jnp.float32)
    params = init_params(kp, INPUT_NUM, OUTPUT_NUM, HIDDEN_DIM)

    # (which_norm, extra kwargs) -- the extra cases exercise the tiled code paths
    # at small scale (three-phase BN accumulator; batch-tiled parallel plain grid).
    cases = [
        ("batch_norm", {}),                     # fused single-block BN
        ("batch_norm", {"bn_tile_rows": 16}),   # tiled three-phase BN, grid=(3,3)
        ("weight_norm", {}),                    # single full-dim tile, no pad/slice
        ("weight_norm", {"batch_tile": 16}),    # batch-tiled plain path, grid=(3,)
        ("spectral_norm", {}),
    ]

    ok = True
    for which_norm, kw in cases:
        prepped = prepare_params(params, which_norm)      # one-time parameter glue
        fwd = jax.jit(functools.partial(fc_net_forward, which_norm=which_norm,
                                        out_dim=OUTPUT_NUM, **kw))
        out = jax.block_until_ready(fwd(x, prepped))
        ref = _reference(x, params, which_norm)
        # bf16 matmuls; BN paths get a looser bound (rounding-boundary flips of the
        # bf16-cast normalized activations propagate through two BN layers).
        tol = 1e-2 if which_norm == "batch_norm" else 2e-3
        err = float(jnp.max(jnp.abs(out - ref)))
        if (out.shape != ref.shape or not bool(jnp.isfinite(out).all())
                or err > tol):
            ok = False
            print(f"MISMATCH {which_norm} {kw}: max abs err {err:.3e}")

    if ok:
        print("KERNEL_OK")
</pallas_src>

<mosaic_0001>
module attributes {stable_mosaic.version = 11 : i64} {
  func.func @_fc_bn_kernel(%arg0: i32, %arg1: memref<48x128xbf16, #tpu.memory_space<vmem>>, %arg2: memref<128x128xbf16, #tpu.memory_space<vmem>>, %arg3: memref<128x128xbf16, #tpu.memory_space<vmem>>, %arg4: memref<128x128xbf16, #tpu.memory_space<vmem>>, %arg5: memref<8x128xf32, #tpu.memory_space<vmem>>, %arg6: memref<1x128xf32, #tpu.memory_space<vmem>>, %arg7: memref<48x128xf32, #tpu.memory_space<vmem>>) attributes {dimension_semantics = [#tpu.dimension_semantics<arbitrary>], iteration_bounds = array<i64: 1>, scalar_prefetch = 0 : i64, scratch_operands = 0 : i64, tpu.core_type = #tpu.core_type<tc>, window_params = [{pipeline_mode = #tpu.pipeline_mode<synchronous>, transform_indices = @transform_0, window_bounds = array<i64: 48, 128>}, {pipeline_mode = #tpu.pipeline_mode<synchronous>, transform_indices = @transform_1, window_bounds = array<i64: 128, 128>}, {pipeline_mode = #tpu.pipeline_mode<synchronous>, transform_indices = @transform_2, window_bounds = array<i64: 128, 128>}, {pipeline_mode = #tpu.pipeline_mode<synchronous>, transform_indices = @transform_3, window_bounds = array<i64: 128, 128>}, {pipeline_mode = #tpu.pipeline_mode<synchronous>, transform_indices = @transform_4, window_bounds = array<i64: 8, 128>}, {pipeline_mode = #tpu.pipeline_mode<synchronous>, transform_indices = @transform_5, window_bounds = array<i64: 1, 128>}, {pipeline_mode = #tpu.pipeline_mode<synchronous>, transform_indices = @transform_6, window_bounds = array<i64: 48, 128>}]} {
    %c0 = arith.constant 0 : index
    %c0_0 = arith.constant 0 : index
    %0 = vector.load %arg1[%c0, %c0_0] : memref<48x128xbf16, #tpu.memory_space<vmem>>, vector<48x128xbf16>
    %c0_1 = arith.constant 0 : index
    %c0_2 = arith.constant 0 : index
    %1 = vector.load %arg5[%c0_1, %c0_2] : memref<8x128xf32, #tpu.memory_space<vmem>>, vector<1x128xf32>
    %c1 = arith.constant 1 : index
    %c0_3 = arith.constant 0 : index
    %2 = vector.load %arg5[%c1, %c0_3] : memref<8x128xf32, #tpu.memory_space<vmem>>, vector<1x128xf32>
    %c2 = arith.constant 2 : index
    %c0_4 = arith.constant 0 : index
    %3 = vector.load %arg5[%c2, %c0_4] : memref<8x128xf32, #tpu.memory_space<vmem>>, vector<1x128xf32>
    %c3 = arith.constant 3 : index
    %c0_5 = arith.constant 0 : index
    %4 = vector.load %arg5[%c3, %c0_5] : memref<8x128xf32, #tpu.memory_space<vmem>>, vector<1x128xf32>
    %c4 = arith.constant 4 : index
    %c0_6 = arith.constant 0 : index
    %5 = vector.load %arg5[%c4, %c0_6] : memref<8x128xf32, #tpu.memory_space<vmem>>, vector<1x128xf32>
    %c5 = arith.constant 5 : index
    %c0_7 = arith.constant 0 : index
    %6 = vector.load %arg5[%c5, %c0_7] : memref<8x128xf32, #tpu.memory_space<vmem>>, vector<1x128xf32>
    %c0_8 = arith.constant 0 : index
    %c0_9 = arith.constant 0 : index
    %7 = vector.load %arg2[%c0_8, %c0_9] : memref<128x128xbf16, #tpu.memory_space<vmem>>, vector<128x128xbf16>
    %cst = arith.constant dense<0.000000e+00> : vector<48x128xf32>
    %8 = tpu.matmul %0, %7, %cst {dimension_numbers = #tpu.dot_dimension_numbers<[1], [0], [0], [1], [0, 0, 1, 1], [], []>} : vector<48x128xbf16>, vector<128x128xbf16>, vector<48x128xf32> -> vector<48x128xf32>
    %9 = vector.broadcast %1 : vector<1x128xf32> to vector<48x128xf32>
    %10 = arith.addf %8, %9 : vector<48x128xf32>
    %cst_10 = arith.constant dense<0.000000e+00> : vector<128xf32>
    %11 = vector.multi_reduction <add>, %10, %cst_10 [0] : vector<48x128xf32> to vector<128xf32>
    %12 = vector.shape_cast %11 : vector<128xf32> to vector<1x128xf32>
    %cst_11 = arith.constant 4.800000e+01 : f32
    %13 = vector.broadcast %cst_11 : f32 to vector<1x128xf32>
    %14 = arith.divf %12, %13 : vector<1x128xf32>
    %15 = vector.broadcast %14 : vector<1x128xf32> to vector<48x128xf32>
    %16 = arith.subf %10, %15 : vector<48x128xf32>
    %17 = arith.mulf %16, %16 : vector<48x128xf32>
    %cst_12 = arith.constant dense<0.000000e+00> : vector<128xf32>
    %18 = vector.multi_reduction <add>, %17, %cst_12 [0] : vector<48x128xf32> to vector<128xf32>
    %19 = vector.shape_cast %18 : vector<128xf32> to vector<1x128xf32>
    %cst_13 = arith.constant 4.800000e+01 : f32
    %20 = vector.broadcast %cst_13 : f32 to vector<1x128xf32>
    %21 = arith.divf %19, %20 : vector<1x128xf32>
    %cst_14 = arith.constant 9.99999974E-6 : f32
    %22 = vector.broadcast %cst_14 : f32 to vector<1x128xf32>
    %23 = arith.addf %21, %22 : vector<1x128xf32>
    %24 = math.rsqrt %23 : vector<1x128xf32>
    %25 = vector.broadcast %24 : vector<1x128xf32> to vector<48x128xf32>
    %26 = arith.mulf %16, %25 : vector<48x128xf32>
    %27 = vector.broadcast %2 : vector<1x128xf32> to vector<48x128xf32>
    %28 = arith.mulf %26, %27 : vector<48x128xf32>
    %29 = vector.broadcast %3 : vector<1x128xf32> to vector<48x128xf32>
    %30 = arith.addf %28, %29 : vector<48x128xf32>
    %31 = arith.truncf %30 : vector<48x128xf32> to vector<48x128xbf16>
    %c0_15 = arith.constant 0 : index
    %c0_16 = arith.constant 0 : index
    %32 = vector.load %arg3[%c0_15, %c0_16] : memref<128x128xbf16, #tpu.memory_space<vmem>>, vector<128x128xbf16>
    %cst_17 = arith.constant dense<0.000000e+00> : vector<48x128xf32>
    %33 = tpu.matmul %31, %32, %cst_17 {dimension_numbers = #tpu.dot_dimension_numbers<[1], [0], [0], [1], [0, 0, 1, 1], [], []>} : vector<48x128xbf16>, vector<128x128xbf16>, vector<48x128xf32> -> vector<48x128xf32>
    %34 = vector.broadcast %4 : vector<1x128xf32> to vector<48x128xf32>
    %35 = arith.addf %33, %34 : vector<48x128xf32>
    %cst_18 = arith.constant 0.000000e+00 : f32
    %36 = vector.broadcast %cst_18 : f32 to vector<48x128xf32>
    %37 = arith.maximumf %35, %36 : vector<48x128xf32>
    %cst_19 = arith.constant dense<0.000000e+00> : vector<128xf32>
    %38 = vector.multi_reduction <add>, %37, %cst_19 [0] : vector<48x128xf32> to vector<128xf32>
    %39 = vector.shape_cast %38 : vector<128xf32> to vector<1x128xf32>
    %cst_20 = arith.constant 4.800000e+01 : f32
    %40 = vector.broadcast %cst_20 : f32 to vector<1x128xf32>
    %41 = arith.divf %39, %40 : vector<1x128xf32>
    %42 = vector.broadcast %41 : vector<1x128xf32> to vector<48x128xf32>
    %43 = arith.subf %37, %42 : vector<48x128xf32>
    %44 = arith.mulf %43, %43 : vector<48x128xf32>
    %cst_21 = arith.constant dense<0.000000e+00> : vector<128xf32>
    %45 = vector.multi_reduction <add>, %44, %cst_21 [0] : vector<48x128xf32> to vector<128xf32>
    %46 = vector.shape_cast %45 : vector<128xf32> to vector<1x128xf32>
    %cst_22 = arith.constant 4.800000e+01 : f32
    %47 = vector.broadcast %cst_22 : f32 to vector<1x128xf32>
    %48 = arith.divf %46, %47 : vector<1x128xf32>
    %cst_23 = arith.constant 9.99999974E-6 : f32
    %49 = vector.broadcast %cst_23 : f32 to vector<1x128xf32>
    %50 = arith.addf %48, %49 : vector<1x128xf32>
    %51 = math.rsqrt %50 : vector<1x128xf32>
    %52 = vector.broadcast %51 : vector<1x128xf32> to vector<48x128xf32>
    %53 = arith.mulf %43, %52 : vector<48x128xf32>
    %54 = vector.broadcast %5 : vector<1x128xf32> to vector<48x128xf32>
    %55 = arith.mulf %53, %54 : vector<48x128xf32>
    %56 = vector.broadcast %6 : vector<1x128xf32> to vector<48x128xf32>
    %57 = arith.addf %55, %56 : vector<48x128xf32>
    %58 = arith.truncf %57 : vector<48x128xf32> to vector<48x128xbf16>
    %c0_24 = arith.constant 0 : index
    %c0_25 = arith.constant 0 : index
    %59 = vector.load %arg4[%c0_24, %c0_25] : memref<128x128xbf16, #tpu.memory_space<vmem>>, vector<128x128xbf16>
    %cst_26 = arith.constant dense<0.000000e+00> : vector<48x128xf32>
    %60 = tpu.matmul %58, %59, %cst_26 {dimension_numbers = #tpu.dot_dimension_numbers<[1], [0], [0], [1], [0, 0, 1, 1], [], []>} : vector<48x128xbf16>, vector<128x128xbf16>, vector<48x128xf32> -> vector<48x128xf32>
    %c0_27 = arith.constant 0 : index
    %c0_28 = arith.constant 0 : index
    %61 = vector.load %arg6[%c0_27, %c0_28] : memref<1x128xf32, #tpu.memory_space<vmem>>, vector<1x128xf32>
    %62 = vector.broadcast %61 : vector<1x128xf32> to vector<48x128xf32>
    %63 = arith.addf %60, %62 : vector<48x128xf32>
    %c0_29 = arith.constant 0 : index
    %c0_30 = arith.constant 0 : index
    %64 = vector.load %arg7[%c0_29, %c0_30] : memref<48x128xf32, #tpu.memory_space<vmem>>, vector<48x128xf32>
    tpu.vector_store %arg7[%c0_29, %c0_30], %63 {strides = array<i32>} : memref<48x128xf32, #tpu.memory_space<vmem>>, vector<48x128xf32>,
    return
  }
  func.func @transform_0(%arg0: i32) -> (i32, i32) {
    %c0_i32 = arith.constant 0 : i32
    %c0_i32_0 = arith.constant 0 : i32
    %c0_i32_1 = arith.constant 0 : i32
    return %c0_i32, %c0_i32_0 : i32, i32
  }
  func.func @transform_1(%arg0: i32) -> (i32, i32) {
    %c0_i32 = arith.constant 0 : i32
    %c0_i32_0 = arith.constant 0 : i32
    %c0_i32_1 = arith.constant 0 : i32
    return %c0_i32, %c0_i32_0 : i32, i32
  }
  func.func @transform_2(%arg0: i32) -> (i32, i32) {
    %c0_i32 = arith.constant 0 : i32
    %c0_i32_0 = arith.constant 0 : i32
    %c0_i32_1 = arith.constant 0 : i32
    return %c0_i32, %c0_i32_0 : i32, i32
  }
  func.func @transform_3(%arg0: i32) -> (i32, i32) {
    %c0_i32 = arith.constant 0 : i32
    %c0_i32_0 = arith.constant 0 : i32
    %c0_i32_1 = arith.constant 0 : i32
    return %c0_i32, %c0_i32_0 : i32, i32
  }
  func.func @transform_4(%arg0: i32) -> (i32, i32) {
    %c0_i32 = arith.constant 0 : i32
    %c0_i32_0 = arith.constant 0 : i32
    %c0_i32_1 = arith.constant 0 : i32
    return %c0_i32, %c0_i32_0 : i32, i32
  }
  func.func @transform_5(%arg0: i32) -> (i32, i32) {
    %c0_i32 = arith.constant 0 : i32
    %c0_i32_0 = arith.constant 0 : i32
    %c0_i32_1 = arith.constant 0 : i32
    return %c0_i32, %c0_i32_0 : i32, i32
  }
  func.func @transform_6(%arg0: i32) -> (i32, i32) {
    %c0_i32 = arith.constant 0 : i32
    %c0_i32_0 = arith.constant 0 : i32
    %c0_i32_1 = arith.constant 0 : i32
    return %c0_i32, %c0_i32_0 : i32, i32
  }
}

</mosaic_0001>

<llo_original>
// kernel: fc_net_forward.1
$region0: #{fc_net_forward.1}
  #allocation0 [shape = 'u32[]', space=smem, size = 0x4, offset = 0x4, fixed_abs, tag = 'smem constant byte address 0x4 - core index']
  #allocation1 [shape = 'u32[144,128]{1,0:T(1,128)}', space=vmem, size = 0x12000, scoped, tag = 'internal scratch']
  %s0 = inlined_call_operand.vmem [shape: bf16[48,128], index: 0, kind: input, shape index: {}]
  %s1 = inlined_call_operand.vmem [shape: bf16[128,128], index: 1, kind: input, shape index: {}]
  %s2 = inlined_call_operand.hbm [shape: bf16[128,128], index: 2, kind: input, shape index: {}]
  %s3 = inlined_call_operand.hbm [shape: bf16[128,128], index: 3, kind: input, shape index: {}]
  %s4 = inlined_call_operand.vmem [shape: f32[8,128], index: 4, kind: input, shape index: {}]
  %s5 = inlined_call_operand.vmem [shape: f32[1,128], index: 5, kind: input, shape index: {}]
  %s6 = inlined_call_operand.vmem [shape: f32[48,128], index: 6, kind: output, shape index: {}]
  %s7 = sld [smem:[#allocation0]]
  $region42: #{fc_net_forward.1} parent=0
    _
  %s9 = ssub.s32 1, %s7
  %s10 = scalar_select 0, %s9, %s7
  $region1: #{fc_net_forward.1} parent=0
    #allocation2 [shape = 'u8[32768]{0}', space=vmem, size = 0x8000, scoped, tag = 'input window, operand 2, single buffered']
    #allocation3 [shape = 's32[1]{0}', space=sflag, size = 0x4, scoped, tag = 'scoped memory for fc_net_forward.1']
    #allocation4 [shape = 'u8[32768]{0}', space=vmem, size = 0x8000, scoped, tag = 'input window, operand 3, single buffered']
    #allocation5 [shape = 's32[1]{0}', space=sflag, size = 0x4, scoped, tag = 'scoped memory for fc_net_forward.1']
    %11 = vsyncpa [#allocation3], 0
    %12 = vsyncpa [#allocation5], 0
    // Predicated region
    $region2: #{fc_net_forward.1} parent=1 // pred_check
      _
    $region3: #{fc_net_forward.1} parent=1 // pred_check_branch
      %14 = sbr.rel (0) target = $region5
    $region4: #{fc_net_forward.1} parent=1 // pred_region
      _
    $region5: #{fc_net_forward.1} parent=1 // pred_fallthru
      _
    // Predicated region
    $region6: #{fc_net_forward.1} parent=1 // pred_check
      _
    $region7: #{fc_net_forward.1} parent=1 // pred_check_branch
      %16 = sbr.rel (0) target = $region9
    $region8: #{fc_net_forward.1} parent=1 // pred_region
      _
    $region9: #{fc_net_forward.1} parent=1 // pred_fallthru
      _
    // Predicated region
    $region10: #{fc_net_forward.1} parent=1 // pred_check
      _
    $region11: #{fc_net_forward.1} parent=1 // pred_check_branch
      %18 = sbr.rel (0) target = $region13
    $region12: #{fc_net_forward.1} parent=1 // pred_region
      %s20 = ssub.s32 1024, 1024
      %21 = vsyncadd [#allocation3], %s20
      %s22 = sshll.u32 [#allocation2], 4
      %s23 = int_to_ptr.vmem [resolvable:$true] %s22
      %28 = dma.hbm_to_vmem [thread:$0]  %s2, 1024, %s23, [#allocation3], 64, 64, 4
    $region13: #{fc_net_forward.1} parent=1 // pred_fallthru
      _
    // Predicated region
    $region14: #{fc_net_forward.1} parent=1 // pred_check
      _
    $region15: #{fc_net_forward.1} parent=1 // pred_check_branch
      %30 = sbr.rel (0) target = $region17
    $region16: #{fc_net_forward.1} parent=1 // pred_region
      %s32 = ssub.s32 1024, 1024
      %33 = vsyncadd [#allocation5], %s32
      %s34 = sshll.u32 [#allocation4], 4
      %s35 = int_to_ptr.vmem [resolvable:$true] %s34
      %40 = dma.hbm_to_vmem [thread:$0]  %s3, 1024, %s35, [#allocation5], 64, 64, 4
    $region17: #{fc_net_forward.1} parent=1 // pred_fallthru
      _
    // Predicated region
    $region18: #{fc_net_forward.1} parent=1 // pred_check
      _
    $region19: #{fc_net_forward.1} parent=1 // pred_check_branch
      %42 = sbr.rel (0) target = $region21
    $region20: #{fc_net_forward.1} parent=1 // pred_region
      _
    $region21: #{fc_net_forward.1} parent=1 // pred_fallthru
      _
    // Predicated region
    $region22: #{fc_net_forward.1} parent=1 // pred_check
      _
    $region23: #{fc_net_forward.1} parent=1 // pred_check_branch
      %44 = sbr.rel (0) target = $region25
    $region24: #{fc_net_forward.1} parent=1 // pred_region
      _
    $region25: #{fc_net_forward.1} parent=1 // pred_fallthru
      _
    // Predicated region
    $region26: #{fc_net_forward.1} parent=1 // pred_check
      _
    $region27: #{fc_net_forward.1} parent=1 // pred_check_branch
      %46 = sbr.rel (0) target = $region29
    $region28: #{fc_net_forward.1} parent=1 // pred_region
      %47 = dma.done [#allocation3], 1024
    $region29: #{fc_net_forward.1} parent=1 // pred_fallthru
      _
    // Predicated region
    $region30: #{fc_net_forward.1} parent=1 // pred_check
      _
    $region31: #{fc_net_forward.1} parent=1 // pred_check_branch
      %49 = sbr.rel (0) target = $region33
    $region32: #{fc_net_forward.1} parent=1 // pred_region
      %50 = dma.done [#allocation5], 1024
    $region33: #{fc_net_forward.1} parent=1 // pred_fallthru
      _
    %v52 = vld [vmem:[%s0] sm:$0xf]
    %v53 = vld [vmem:[%s0 + $0x4] sm:$0xf]
    %v54 = vld [vmem:[%s0 + $0x8] sm:$0xf]
    %v55 = vld [vmem:[%s0 + $0xc] sm:$0xf]
    %v56 = vld [vmem:[%s0 + $0x10] sm:$0xf]
    %v57 = vld [vmem:[%s0 + $0x14] sm:$0xf]
    %v58 = vld [vmem:[%s4] sm:$0x1]
    %v59 = vld [vmem:[%s4 + $0x1] sm:$0x1]
    %v60 = vld [vmem:[%s4 + $0x2] sm:$0x1]
    %v61 = vld [vmem:[%s4 + $0x3] sm:$0x1]
    %v62 = vld [vmem:[%s4 + $0x4] sm:$0x1]
    %v63 = vld [vmem:[%s4 + $0x5] sm:$0x1]
    %v64 = vld [vmem:[%s1] sm:$0xf]
    %v65 = vld [vmem:[%s1 + $0x4] sm:$0xf]
    %v66 = vld [vmem:[%s1 + $0x8] sm:$0xf]
    %v67 = vld [vmem:[%s1 + $0xc] sm:$0xf]
    %v68 = vld [vmem:[%s1 + $0x10] sm:$0xf]
    %v69 = vld [vmem:[%s1 + $0x14] sm:$0xf]
    %v70 = vld [vmem:[%s1 + $0x18] sm:$0xf]
    %v71 = vld [vmem:[%s1 + $0x1c] sm:$0xf]
    %v72 = vld [vmem:[%s1 + $0x20] sm:$0xf]
    %v73 = vld [vmem:[%s1 + $0x24] sm:$0xf]
    %v74 = vld [vmem:[%s1 + $0x28] sm:$0xf]
    %v75 = vld [vmem:[%s1 + $0x2c] sm:$0xf]
    %v76 = vld [vmem:[%s1 + $0x30] sm:$0xf]
    %v77 = vld [vmem:[%s1 + $0x34] sm:$0xf]
    %v78 = vld [vmem:[%s1 + $0x38] sm:$0xf]
    %v79 = vld [vmem:[%s1 + $0x3c] sm:$0xf]
    %v80 = vlaneseq
    %v81 = vshrl.u32 %v80, 7
    %v82 = vsub.s32 0, %v81
    %v83 = vrot.slane %v58, %v82
    %v90 = vunpack.c.l.b16 %v52
    %v91 = vunpack.c.l.b16 %v53
    %v92 = vunpack.c.l.b16 %v54
    %v93 = vunpack.c.l.b16 %v55
    %v94 = vunpack.c.l.b16 %v56
    %v95 = vunpack.c.l.b16 %v57
    %v96 = vpack.c.b16 %v91, %v90
    %v97 = vpack.c.b16 %v93, %v92
    %v98 = vpack.c.b16 %v95, %v94
    %v118 = vunpack.c.l.b16 %v64
    %v119 = vunpack.c.l.b16 %v65
    %v120 = vunpack.c.l.b16 %v66
    %v121 = vunpack.c.l.b16 %v67
    %v122 = vunpack.c.l.b16 %v68
    %v123 = vunpack.c.l.b16 %v69
    %v124 = vunpack.c.l.b16 %v70
    %v125 = vunpack.c.l.b16 %v71
    %v126 = vunpack.c.l.b16 %v72
    %v127 = vunpack.c.l.b16 %v73
    %v128 = vunpack.c.l.b16 %v74
    %v129 = vunpack.c.l.b16 %v75
    %v130 = vunpack.c.l.b16 %v76
    %v131 = vunpack.c.l.b16 %v77
    %v132 = vunpack.c.l.b16 %v78
    %v133 = vunpack.c.l.b16 %v79
    %v134 = vpack.c.b16 %v119, %v118
    %v135 = vpack.c.b16 %v121, %v120
    %v136 = vpack.c.b16 %v123, %v122
    %v137 = vpack.c.b16 %v125, %v124
    %v138 = vpack.c.b16 %v127, %v126
    %v139 = vpack.c.b16 %v129, %v128
    %v140 = vpack.c.b16 %v131, %v130
    %v141 = vpack.c.b16 %v133, %v132
    %150 = vmatprep.subr.bf16.mxu0 0
    %151 = vmatpush1.bf16.msra.mxu0 %v134
    %152 = vmatprep.subr.bf16.mxu0 0
    %153 = vmatpush1.bf16.msra.mxu0 %v135
    %154 = vmatprep.subr.bf16.mxu0 0
    %155 = vmatpush1.bf16.msra.mxu0 %v136
    %156 = vmatprep.subr.bf16.mxu0 0
    %157 = vmatpush1.bf16.msra.mxu0 %v137
    %158 = vmatprep.subr.bf16.mxu0 0
    %159 = vmatpush1.bf16.msra.mxu0 %v138
    %160 = vmatprep.subr.bf16.mxu0 0
    %161 = vmatpush1.bf16.msra.mxu0 %v139
    %162 = vmatprep.subr.bf16.mxu0 0
    %163 = vmatpush1.bf16.msra.mxu0 %v140
    %164 = vmatprep.subr.bf16.mxu0 0
    %165 = vmatpush1.bf16.msra.mxu0 %v141
    %166 = vmatprep.subr.bf16.mxu0 0
    %167 = vmatpush1.bf16.msra.mxu0 0
    %168 = vmatprep.subr.bf16.mxu0 0
    %169 = vmatpush1.bf16.msra.mxu0 0
    %170 = vmatprep.subr.bf16.mxu0 0
    %171 = vmatpush1.bf16.msra.mxu0 0
    %172 = vmatprep.subr.bf16.mxu0 0
    %173 = vmatpush1.bf16.msra.mxu0 0
    %174 = vmatprep.subr.bf16.mxu0 0
    %175 = vmatpush1.bf16.msra.mxu0 0
    %176 = vmatprep.subr.bf16.mxu0 0
    %177 = vmatpush1.bf16.msra.mxu0 0
    %178 = vmatprep.subr.bf16.mxu0 0
    %179 = vmatpush1.bf16.msra.mxu0 0
    %180 = vmatprep.subr.bf16.mxu0 0
    %181 = vmatpush1.bf16.msra.mxu0 0
    %182 = vmatprep.mubr.bf16.mxu0 0
    %183 = vmatmul.mubr.bf16.gmra.mrb[0].mxu0 %v96
    %v184 = vpop.f32.mrb[0].mxu0
    %v185 = vadd.f32 %v83, %v184
    %v186 = vpop.f32.mrb[0].mxu0
    %v187 = vpop.f32.mrb[0].mxu0
    %v188 = vadd.f32 %v83, %v187
    %v189 = vpop.f32.mrb[0].mxu0
    %190 = vmatprep.mubr.bf16.mxu0 0
    %191 = vmatmul.mubr.bf16.gmra.mrb[0].mxu0 %v97
    %v192 = vpop.f32.mrb[0].mxu0
    %v193 = vadd.f32 %v83, %v192
    %v194 = vpop.f32.mrb[0].mxu0
    %v195 = vpop.f32.mrb[0].mxu0
    %v196 = vadd.f32 %v83, %v195
    %v197 = vpop.f32.mrb[0].mxu0
    %198 = vmatprep.mubr.bf16.mxu0 0
    %199 = vmatmul.mubr.bf16.gmra.mrb[0].mxu0 %v98
    %v200 = vpop.f32.mrb[0].mxu0
    %v201 = vadd.f32 %v83, %v200
    %v202 = vpop.f32.mrb[0].mxu0
    %v203 = vpop.f32.mrb[0].mxu0
    %v204 = vadd.f32 %v83, %v203
    %v205 = vpop.f32.mrb[0].mxu0
    %206 = vdwg.mxu0
    %v207 = vadd.f32 %v185, %v188
    %v208 = vadd.f32 %v207, %v193
    %v209 = vadd.f32 %v208, %v196
    %v210 = vadd.f32 %v209, %v201
    %v211 = vadd.f32 %v210, %v204
    %v212 = vrot.slane %v211, 4
    %v213 = vadd.f32 %v211, %v212
    %v214 = vrot.slane %v213, 2
    %v215 = vadd.f32 %v213, %v214
    %v216 = vrot.slane %v215, 1
    %v217 = vadd.f32 %v215, %v216
    %v218 = vrcp.pop 48.0
    %v219 = vmul.f32 %v217, %v218
    %v220 = vsub.f32 %v185, %v219
    %v221 = vsub.f32 %v188, %v219
    %v222 = vsub.f32 %v193, %v219
    %v223 = vsub.f32 %v196, %v219
    %v224 = vsub.f32 %v201, %v219
    %v225 = vsub.f32 %v204, %v219
    %v226 = vmul.f32 %v220, %v220
    %v227 = vmul.f32 %v221, %v221
    %v228 = vmul.f32 %v222, %v222
    %v229 = vmul.f32 %v223, %v223
    %v230 = vmul.f32 %v224, %v224
    %v231 = vmul.f32 %v225, %v225
    %v232 = vadd.f32 %v226, %v227
    %v233 = vadd.f32 %v232, %v228
    %v234 = vadd.f32 %v233, %v229
    %v235 = vadd.f32 %v234, %v230
    %v236 = vadd.f32 %v235, %v231
    %v237 = vrot.slane %v236, 4
    %v238 = vadd.f32 %v236, %v237
    %v239 = vrot.slane %v238, 2
    %v240 = vadd.f32 %v238, %v239
    %v241 = vrot.slane %v240, 1
    %v242 = vadd.f32 %v240, %v241
    %v243 = vmul.f32 %v242, %v218
    %v244 = vadd.f32 %v243, 1e-05
    %v245 = vrsqrt.pop %v244
    %v246 = vmul.f32 %v220, %v245
    %v247 = vmul.f32 %v221, %v245
    %v248 = vmul.f32 %v222, %v245
    %v249 = vmul.f32 %v223, %v245
    %v250 = vmul.f32 %v224, %v245
    %v251 = vmul.f32 %v225, %v245
    %v252 = vlaneseq
    %v253 = vshrl.u32 %v252, 7
    %v254 = vsub.s32 0, %v253
    %v255 = vrot.slane %v59, %v254
    %v256 = vmul.f32 %v246, %v255
    %v257 = vmul.f32 %v247, %v255
    %v258 = vmul.f32 %v248, %v255
    %v259 = vmul.f32 %v249, %v255
    %v260 = vmul.f32 %v250, %v255
    %v261 = vmul.f32 %v251, %v255
    %v262 = vlaneseq
    %v263 = vshrl.u32 %v262, 7
    %v264 = vsub.s32 0, %v263
    %v265 = vrot.slane %v60, %v264
    %v266 = vadd.f32 %v256, %v265
    %v267 = vadd.f32 %v257, %v265
    %v268 = vadd.f32 %v258, %v265
    %v269 = vadd.f32 %v259, %v265
    %v270 = vadd.f32 %v260, %v265
    %v271 = vadd.f32 %v261, %v265
    %v272 = vpack.c.bf16 %v267, %v266
    %v273 = vpack.c.bf16 %v269, %v268
    %v274 = vpack.c.bf16 %v271, %v270
    %v275 = vld [vmem:[#allocation2] sm:$0xf]
    %v276 = vld [vmem:[#allocation2 + $0x4] sm:$0xf]
    %v277 = vld [vmem:[#allocation2 + $0x8] sm:$0xf]
    %v278 = vld [vmem:[#allocation2 + $0xc] sm:$0xf]
    %v279 = vld [vmem:[#allocation2 + $0x10] sm:$0xf]
    %v280 = vld [vmem:[#allocation2 + $0x14] sm:$0xf]
    %v281 = vld [vmem:[#allocation2 + $0x18] sm:$0xf]
    %v282 = vld [vmem:[#allocation2 + $0x1c] sm:$0xf]
    %v283 = vld [vmem:[#allocation2 + $0x20] sm:$0xf]
    %v284 = vld [vmem:[#allocation2 + $0x24] sm:$0xf]
    %v285 = vld [vmem:[#allocation2 + $0x28] sm:$0xf]
    %v286 = vld [vmem:[#allocation2 + $0x2c] sm:$0xf]
    %v287 = vld [vmem:[#allocation2 + $0x30] sm:$0xf]
    %v288 = vld [vmem:[#allocation2 + $0x34] sm:$0xf]
    %v289 = vld [vmem:[#allocation2 + $0x38] sm:$0xf]
    %v290 = vld [vmem:[#allocation2 + $0x3c] sm:$0xf]
    %v291 = vlaneseq
    %v292 = vshrl.u32 %v291, 7
    %v293 = vsub.s32 0, %v292
    %v294 = vrot.slane %v61, %v293
    %v311 = vunpack.c.l.b16 %v275
    %v312 = vunpack.c.l.b16 %v276
    %v313 = vunpack.c.l.b16 %v277
    %v314 = vunpack.c.l.b16 %v278
    %v315 = vunpack.c.l.b16 %v279
    %v316 = vunpack.c.l.b16 %v280
    %v317 = vunpack.c.l.b16 %v281
    %v318 = vunpack.c.l.b16 %v282
    %v319 = vunpack.c.l.b16 %v283
    %v320 = vunpack.c.l.b16 %v284
    %v321 = vunpack.c.l.b16 %v285
    %v322 = vunpack.c.l.b16 %v286
    %v323 = vunpack.c.l.b16 %v287
    %v324 = vunpack.c.l.b16 %v288
    %v325 = vunpack.c.l.b16 %v289
    %v326 = vunpack.c.l.b16 %v290
    %v327 = vpack.c.b16 %v312, %v311
    %v328 = vpack.c.b16 %v314, %v313
    %v329 = vpack.c.b16 %v316, %v315
    %v330 = vpack.c.b16 %v318, %v317
    %v331 = vpack.c.b16 %v320, %v319
    %v332 = vpack.c.b16 %v322, %v321
    %v333 = vpack.c.b16 %v324, %v323
    %v334 = vpack.c.b16 %v326, %v325
    %343 = vmatprep.subr.bf16.mxu0 0
    %344 = vmatpush1.bf16.msra.mxu0 %v327
    %345 = vmatprep.subr.bf16.mxu0 0
    %346 = vmatpush1.bf16.msra.mxu0 %v328
    %347 = vmatprep.subr.bf16.mxu0 0
    %348 = vmatpush1.bf16.msra.mxu0 %v329
    %349 = vmatprep.subr.bf16.mxu0 0
    %350 = vmatpush1.bf16.msra.mxu0 %v330
    %351 = vmatprep.subr.bf16.mxu0 0
    %352 = vmatpush1.bf16.msra.mxu0 %v331
    %353 = vmatprep.subr.bf16.mxu0 0
    %354 = vmatpush1.bf16.msra.mxu0 %v332
    %355 = vmatprep.subr.bf16.mxu0 0
    %356 = vmatpush1.bf16.msra.mxu0 %v333
    %357 = vmatprep.subr.bf16.mxu0 0
    %358 = vmatpush1.bf16.msra.mxu0 %v334
    %359 = vmatprep.subr.bf16.mxu0 0
    %360 = vmatpush1.bf16.msra.mxu0 0
    %361 = vmatprep.subr.bf16.mxu0 0
    %362 = vmatpush1.bf16.msra.mxu0 0
    %363 = vmatprep.subr.bf16.mxu0 0
    %364 = vmatpush1.bf16.msra.mxu0 0
    %365 = vmatprep.subr.bf16.mxu0 0
    %366 = vmatpush1.bf16.msra.mxu0 0
    %367 = vmatprep.subr.bf16.mxu0 0
    %368 = vmatpush1.bf16.msra.mxu0 0
    %369 = vmatprep.subr.bf16.mxu0 0
    %370 = vmatpush1.bf16.msra.mxu0 0
    %371 = vmatprep.subr.bf16.mxu0 0
    %372 = vmatpush1.bf16.msra.mxu0 0
    %373 = vmatprep.subr.bf16.mxu0 0
    %374 = vmatpush1.bf16.msra.mxu0 0
    %375 = vmatprep.mubr.bf16.mxu0 0
    %376 = vmatmul.mubr.bf16.gmra.mrb[0].mxu0 %v272
    %v377 = vpop.f32.mrb[0].mxu0
    %v378 = vadd.f32 %v294, %v377
    %v379 = vpop.f32.mrb[0].mxu0
    %v380 = vpop.f32.mrb[0].mxu0
    %v381 = vadd.f32 %v294, %v380
    %v382 = vpop.f32.mrb[0].mxu0
    %383 = vmatprep.mubr.bf16.mxu0 0
    %384 = vmatmul.mubr.bf16.gmra.mrb[0].mxu0 %v273
    %v385 = vpop.f32.mrb[0].mxu0
    %v386 = vadd.f32 %v294, %v385
    %v387 = vpop.f32.mrb[0].mxu0
    %v388 = vpop.f32.mrb[0].mxu0
    %v389 = vadd.f32 %v294, %v388
    %v390 = vpop.f32.mrb[0].mxu0
    %391 = vmatprep.mubr.bf16.mxu0 0
    %392 = vmatmul.mubr.bf16.gmra.mrb[0].mxu0 %v274
    %v393 = vpop.f32.mrb[0].mxu0
    %v394 = vadd.f32 %v294, %v393
    %v395 = vpop.f32.mrb[0].mxu0
    %v396 = vpop.f32.mrb[0].mxu0
    %v397 = vadd.f32 %v294, %v396
    %v398 = vpop.f32.mrb[0].mxu0
    %399 = vdwg.mxu0
    %v400 = vmax.f32 %v378, 0.0
    %v401 = vmax.f32 %v381, 0.0
    %v402 = vmax.f32 %v386, 0.0
    %v403 = vmax.f32 %v389, 0.0
    %v404 = vmax.f32 %v394, 0.0
    %v405 = vmax.f32 %v397, 0.0
    %v406 = vadd.f32 %v400, %v401
    %v407 = vadd.f32 %v406, %v402
    %v408 = vadd.f32 %v407, %v403
    %v409 = vadd.f32 %v408, %v404
    %v410 = vadd.f32 %v409, %v405
    %v411 = vrot.slane %v410, 4
    %v412 = vadd.f32 %v410, %v411
    %v413 = vrot.slane %v412, 2
    %v414 = vadd.f32 %v412, %v413
    %v415 = vrot.slane %v414, 1
    %v416 = vadd.f32 %v414, %v415
    %v417 = vmul.f32 %v416, %v218
    %v418 = vsub.f32 %v400, %v417
    %v419 = vsub.f32 %v401, %v417
    %v420 = vsub.f32 %v402, %v417
    %v421 = vsub.f32 %v403, %v417
    %v422 = vsub.f32 %v404, %v417
    %v423 = vsub.f32 %v405, %v417
    %v424 = vmul.f32 %v418, %v418
    %v425 = vmul.f32 %v419, %v419
    %v426 = vmul.f32 %v420, %v420
    %v427 = vmul.f32 %v421, %v421
    %v428 = vmul.f32 %v422, %v422
    %v429 = vmul.f32 %v423, %v423
    %v430 = vadd.f32 %v424, %v425
    %v431 = vadd.f32 %v430, %v426
    %v432 = vadd.f32 %v431, %v427
    %v433 = vadd.f32 %v432, %v428
    %v434 = vadd.f32 %v433, %v429
    %v435 = vrot.slane %v434, 4
    %v436 = vadd.f32 %v434, %v435
    %v437 = vrot.slane %v436, 2
    %v438 = vadd.f32 %v436, %v437
    %v439 = vrot.slane %v438, 1
    %v440 = vadd.f32 %v438, %v439
    %v441 = vmul.f32 %v440, %v218
    %v442 = vadd.f32 %v441, 1e-05
    %v443 = vrsqrt.pop %v442
    %v444 = vmul.f32 %v418, %v443
    %v445 = vmul.f32 %v419, %v443
    %v446 = vmul.f32 %v420, %v443
    %v447 = vmul.f32 %v421, %v443
    %v448 = vmul.f32 %v422, %v443
    %v449 = vmul.f32 %v423, %v443
    %v450 = vlaneseq
    %v451 = vshrl.u32 %v450, 7
    %v452 = vsub.s32 0, %v451
    %v453 = vrot.slane %v62, %v452
    %v454 = vmul.f32 %v444, %v453
    %v455 = vmul.f32 %v445, %v453
    %v456 = vmul.f32 %v446, %v453
    %v457 = vmul.f32 %v447, %v453
    %v458 = vmul.f32 %v448, %v453
    %v459 = vmul.f32 %v449, %v453
    %v460 = vlaneseq
    %v461 = vshrl.u32 %v460, 7
    %v462 = vsub.s32 0, %v461
    %v463 = vrot.slane %v63, %v462
    %v464 = vadd.f32 %v454, %v463
    %v465 = vadd.f32 %v455, %v463
    %v466 = vadd.f32 %v456, %v463
    %v467 = vadd.f32 %v457, %v463
    %v468 = vadd.f32 %v458, %v463
    %v469 = vadd.f32 %v459, %v463
    %v470 = vpack.c.bf16 %v465, %v464
    %v471 = vpack.c.bf16 %v467, %v466
    %v472 = vpack.c.bf16 %v469, %v468
    %v473 = vld [vmem:[#allocation4] sm:$0xf]
    %v474 = vld [vmem:[#allocation4 + $0x4] sm:$0xf]
    %v475 = vld [vmem:[#allocation4 + $0x8] sm:$0xf]
    %v476 = vld [vmem:[#allocation4 + $0xc] sm:$0xf]
    %v477 = vld [vmem:[#allocation4 + $0x10] sm:$0xf]
    %v478 = vld [vmem:[#allocation4 + $0x14] sm:$0xf]
    %v479 = vld [vmem:[#allocation4 + $0x18] sm:$0xf]
    %v480 = vld [vmem:[#allocation4 + $0x1c] sm:$0xf]
    %v481 = vld [vmem:[#allocation4 + $0x20] sm:$0xf]
    %v482 = vld [vmem:[#allocation4 + $0x24] sm:$0xf]
    %v483 = vld [vmem:[#allocation4 + $0x28] sm:$0xf]
    %v484 = vld [vmem:[#allocation4 + $0x2c] sm:$0xf]
    %v485 = vld [vmem:[#allocation4 + $0x30] sm:$0xf]
    %v486 = vld [vmem:[#allocation4 + $0x34] sm:$0xf]
    %v487 = vld [vmem:[#allocation4 + $0x38] sm:$0xf]
    %v488 = vld [vmem:[#allocation4 + $0x3c] sm:$0xf]
    %v489 = vld [vmem:[%s5] sm:$0x1]
    %v491 = vlaneseq
    %v492 = vshrl.u32 %v491, 7
    %v493 = vsub.s32 0, %v492
    %v494 = vrot.slane %v489, %v493
    %v512 = vunpack.c.l.b16 %v473
    %v513 = vunpack.c.l.b16 %v474
    %v514 = vunpack.c.l.b16 %v475
    %v515 = vunpack.c.l.b16 %v476
    %v516 = vunpack.c.l.b16 %v477
    %v517 = vunpack.c.l.b16 %v478
    %v518 = vunpack.c.l.b16 %v479
    %v519 = vunpack.c.l.b16 %v480
    %v520 = vunpack.c.l.b16 %v481
    %v521 = vunpack.c.l.b16 %v482
    %v522 = vunpack.c.l.b16 %v483
    %v523 = vunpack.c.l.b16 %v484
    %v524 = vunpack.c.l.b16 %v485
    %v525 = vunpack.c.l.b16 %v486
    %v526 = vunpack.c.l.b16 %v487
    %v527 = vunpack.c.l.b16 %v488
    %v528 = vpack.c.b16 %v513, %v512
    %v529 = vpack.c.b16 %v515, %v514
    %v530 = vpack.c.b16 %v517, %v516
    %v531 = vpack.c.b16 %v519, %v518
    %v532 = vpack.c.b16 %v521, %v520
    %v533 = vpack.c.b16 %v523, %v522
    %v534 = vpack.c.b16 %v525, %v524
    %v535 = vpack.c.b16 %v527, %v526
    %544 = vmatprep.subr.bf16.mxu0 0
    %545 = vmatpush1.bf16.msra.mxu0 %v528
    %546 = vmatprep.subr.bf16.mxu0 0
    %547 = vmatpush1.bf16.msra.mxu0 %v529
    %548 = vmatprep.subr.bf16.mxu0 0
    %549 = vmatpush1.bf16.msra.mxu0 %v530
    %550 = vmatprep.subr.bf16.mxu0 0
    %551 = vmatpush1.bf16.msra.mxu0 %v531
    %552 = vmatprep.subr.bf16.mxu0 0
    %553 = vmatpush1.bf16.msra.mxu0 %v532
    %554 = vmatprep.subr.bf16.mxu0 0
    %555 = vmatpush1.bf16.msra.mxu0 %v533
    %556 = vmatprep.subr.bf16.mxu0 0
    %557 = vmatpush1.bf16.msra.mxu0 %v534
    %558 = vmatprep.subr.bf16.mxu0 0
    %559 = vmatpush1.bf16.msra.mxu0 %v535
    %560 = vmatprep.subr.bf16.mxu0 0
    %561 = vmatpush1.bf16.msra.mxu0 0
    %562 = vmatprep.subr.bf16.mxu0 0
    %563 = vmatpush1.bf16.msra.mxu0 0
    %564 = vmatprep.subr.bf16.mxu0 0
    %565 = vmatpush1.bf16.msra.mxu0 0
    %566 = vmatprep.subr.bf16.mxu0 0
    %567 = vmatpush1.bf16.msra.mxu0 0
    %568 = vmatprep.subr.bf16.mxu0 0
    %569 = vmatpush1.bf16.msra.mxu0 0
    %570 = vmatprep.subr.bf16.mxu0 0
    %571 = vmatpush1.bf16.msra.mxu0 0
    %572 = vmatprep.subr.bf16.mxu0 0
    %573 = vmatpush1.bf16.msra.mxu0 0
    %574 = vmatprep.subr.bf16.mxu0 0
    %575 = vmatpush1.bf16.msra.mxu0 0
    %576 = vmatprep.mubr.bf16.mxu0 0
    %577 = vmatmul.mubr.bf16.gmra.mrb[0].mxu0 %v470
    %v578 = vpop.f32.mrb[0].mxu0
    %v579 = vadd.f32 %v494, %v578
    %v580 = vpop.f32.mrb[0].mxu0
    %v581 = vpop.f32.mrb[0].mxu0
    %v582 = vadd.f32 %v494, %v581
    %v583 = vpop.f32.mrb[0].mxu0
    %584 = vmatprep.mubr.bf16.mxu0 0
    %585 = vmatmul.mubr.bf16.gmra.mrb[0].mxu0 %v471
    %v586 = vpop.f32.mrb[0].mxu0
    %v587 = vadd.f32 %v494, %v586
    %v588 = vpop.f32.mrb[0].mxu0
    %v589 = vpop.f32.mrb[0].mxu0
    %v590 = vadd.f32 %v494, %v589
    %v591 = vpop.f32.mrb[0].mxu0
    %592 = vmatprep.mubr.bf16.mxu0 0
    %593 = vmatmul.mubr.bf16.gmra.mrb[0].mxu0 %v472
    %v594 = vpop.f32.mrb[0].mxu0
    %v595 = vadd.f32 %v494, %v594
    %v596 = vpop.f32.mrb[0].mxu0
    %v597 = vpop.f32.mrb[0].mxu0
    %v598 = vadd.f32 %v494, %v597
    %v599 = vpop.f32.mrb[0].mxu0
    %600 = vdwg.mxu0
    %601 = vst [vmem:[%s6] sm:$0xff] %v579
    %602 = vst [vmem:[%s6 + $0x8] sm:$0xff] %v582
    %603 = vst [vmem:[%s6 + $0x10] sm:$0xff] %v587
    %604 = vst [vmem:[%s6 + $0x18] sm:$0xff] %v590
    %605 = vst [vmem:[%s6 + $0x20] sm:$0xff] %v595
    %606 = vst [vmem:[%s6 + $0x28] sm:$0xff] %v598
    // Predicated region
    $region34: #{fc_net_forward.1} parent=1 // pred_check
      _
    $region35: #{fc_net_forward.1} parent=1 // pred_check_branch
      %608 = sbr.rel (0) target = $region37
    $region36: #{fc_net_forward.1} parent=1 // pred_region
      _
    $region37: #{fc_net_forward.1} parent=1 // pred_fallthru
      _
    // Predicated region
    $region38: #{fc_net_forward.1} parent=1 // pred_check
      _
    $region39: #{fc_net_forward.1} parent=1 // pred_check_branch
      %610 = sbr.rel (0) target = $region41
    $region40: #{fc_net_forward.1} parent=1 // pred_region
      _
    $region41: #{fc_net_forward.1} parent=1 // pred_fallthru
      _
    %611 = vsyncpa [#allocation3], 1
    %612 = vsyncpa [#allocation5], 1

</llo_original>
